<compile_context>
chip_gen: v7x
topology: tpu7x:2x2x1
jax: 0.10.0
libtpu: 0.0.40
codegen_flags: <defaults>
</compile_context>

<pallas_src>
import math
from functools import partial

import jax
import jax.numpy as jnp
from jax import lax
from jax.experimental import pallas as pl
from jax.experimental.pallas import tpu as pltpu

_INV_SQRT2 = 0.7071067811865476


def _round_up(x, m):
    return ((x + m - 1) // m) * m


def _vmem_capacity_bytes():
    """Queried per-core VMEM capacity; conservative v7x fallback (64 MiB)."""
    try:
        info = pltpu.get_tpu_info()
        cap = getattr(info, "vmem_capacity_bytes", None)
        if cap:
            return int(cap)
    except Exception:
        pass
    return 64 << 20


def _gelu(h, exact):
    if exact:
        # Exact (erf-based) GELU in f32, matching torch.nn.GELU() default.
        return 0.5 * h * (1.0 + lax.erf(h * jnp.float32(_INV_SQRT2)))
    # Optional fast path: tanh-approximate GELU (EUP, frees VALU slots).
    return jax.nn.gelu(h, approximate=True)


def _ffn_kernel_inplace(x_ref, w1_ref, b1_ref, w2_ref, b2_ref, o_ref, *, exact_gelu):
    """f32 output: accumulate directly into the resident output block."""
    k = pl.program_id(1)

    h = jnp.dot(x_ref[...].astype(w1_ref.dtype), w1_ref[...],
                preferred_element_type=jnp.float32) + b1_ref[...]
    h = _gelu(h, exact_gelu)
    # Dropout (p=0.1) -> identity in eval mode.
    contrib = jnp.dot(h.astype(w2_ref.dtype), w2_ref[...],
                      preferred_element_type=jnp.float32)

    @pl.when(k == 0)
    def _():
        o_ref[...] = contrib

    @pl.when(k > 0)
    def _():
        o_ref[...] += contrib

    @pl.when(k == pl.num_programs(1) - 1)
    def _():
        o_ref[...] += b2_ref[...]


def _ffn_kernel_acc(x_ref, w1_ref, b1_ref, w2_ref, b2_ref, o_ref, acc_ref, *, exact_gelu):
    """Non-f32 output (e.g. bf16): accumulate in an f32 VMEM scratch."""
    k = pl.program_id(1)

    h = jnp.dot(x_ref[...].astype(w1_ref.dtype), w1_ref[...],
                preferred_element_type=jnp.float32) + b1_ref[...]
    h = _gelu(h, exact_gelu)
    # Dropout (p=0.1) -> identity in eval mode.
    contrib = jnp.dot(h.astype(w2_ref.dtype), w2_ref[...],
                      preferred_element_type=jnp.float32)

    @pl.when(k == 0)
    def _():
        acc_ref[...] = contrib

    @pl.when(k > 0)
    def _():
        acc_ref[...] += contrib

    @pl.when(k == pl.num_programs(1) - 1)
    def _():
        o_ref[...] = (acc_ref[...] + b2_ref[...]).astype(o_ref.dtype)


def prepare_ffn_params(w1, b1, w2, b2, *, compute_dtype=jnp.bfloat16, tile_h=None):
    """Transpose + pad PyTorch nn.Linear params once (outside the hot path).

    w1: (hidden, dim), b1: (hidden,), w2: (dim, hidden), b2: (dim,).
    Weights are cast to `compute_dtype` (bf16 by default: native MXU dtype);
    biases stay f32.  tile_h=None picks the largest hidden chunk that fits the
    chip's VMEM (preferring the weight-resident grid_k==1 configuration).
    """
    hidden, dim = w1.shape
    dim_p = _round_up(dim, 128)
    w_dtype = jnp.dtype(compute_dtype)
    w_isz = w_dtype.itemsize

    cap = _vmem_capacity_bytes()
    budget = cap - (8 << 20)

    hidden_128 = _round_up(hidden, 128)
    if tile_h is None:
        # Weight-resident fast path: both weights double-buffered must fit in
        # <= ~45% of usable VMEM, leaving room for x/out tiles + intermediates.
        resident_bytes = 2 * 2 * dim_p * hidden_128 * w_isz
        if resident_bytes <= 0.45 * budget:
            tile_h = hidden_128
        else:
            tile_h = 128
            for cand in (2048, 1024, 512, 256):
                if cand <= hidden_128 and 4 * dim_p * cand * w_isz <= 0.45 * budget:
                    tile_h = cand
                    break
    tile_h = min(_round_up(tile_h, 128), hidden_128)
    hidden_p = _round_up(hidden, tile_h)

    w1_t = jnp.zeros((dim_p, hidden_p), w_dtype).at[:dim, :hidden].set(
        jnp.asarray(w1).T.astype(w_dtype))
    b1_p = jnp.zeros((1, hidden_p), jnp.float32).at[:, :hidden].set(
        jnp.asarray(b1, jnp.float32)[None, :])
    w2_t = jnp.zeros((hidden_p, dim_p), w_dtype).at[:hidden, :dim].set(
        jnp.asarray(w2).T.astype(w_dtype))
    b2_p = jnp.zeros((1, dim_p), jnp.float32).at[:, :dim].set(
        jnp.asarray(b2, jnp.float32)[None, :])

    return dict(w1_t=w1_t, b1=b1_p, w2_t=w2_t, b2=b2_p,
                dim=dim, hidden=hidden, dim_p=dim_p, hidden_p=hidden_p,
                tile_h=tile_h)


def feedforward_pallas(x, params, *, tile_m=None, exact_gelu=True):
    """x: (..., dim). Returns same shape/dtype as x."""
    dim = x.shape[-1]
    assert dim == params["dim"]
    dim_p, hidden_p, tile_h = params["dim_p"], params["hidden_p"], params["tile_h"]

    w_isz = jnp.dtype(params["w1_t"].dtype).itemsize
    x_isz = jnp.dtype(x.dtype).itemsize
    out_dtype = jnp.dtype(x.dtype)
    o_isz = out_dtype.itemsize
    use_scratch = out_dtype != jnp.dtype(jnp.float32)

    rows = 1
    for d in x.shape[:-1]:
        rows *= d

    cap = _vmem_capacity_bytes()
    budget = cap - (8 << 20)

    weight_bytes = 2 * (dim_p * tile_h + tile_h * dim_p) * w_isz   # double-buffered
    bias_bytes = 2 * 8 * (tile_h + dim_p) * 4

    def _tile_bytes(tm):
        b = 2 * tm * dim_p * x_isz          # x tiles (double-buffered)
        b += 2 * tm * dim_p * o_isz         # out tiles
        b += 3 * tm * tile_h * 4            # GELU / erf f32 intermediates
        if use_scratch:
            b += tm * dim_p * 4             # f32 accumulator scratch
        return b

    if tile_m is None:
        tile_m = 16
        for cand in (1024, 512, 256, 128, 64, 32, 16):
            if cand <= _round_up(rows, 16) and \
               weight_bytes + bias_bytes + _tile_bytes(cand) <= budget:
                tile_m = cand
                break
    tile_m = max(16, _round_up(tile_m, 16))
    rows_p = _round_up(rows, tile_m)

    # Guarantee >= 2 row tiles (when rows allow) so the "parallel" axis can be
    # sharded across the two TensorCores on v7x (megacore).
    if rows_p // tile_m < 2 and rows >= 32:
        tile_m = max(16, _round_up((rows + 1) // 2, 16))
        rows_p = _round_up(rows, tile_m)

    grid = (rows_p // tile_m, hidden_p // tile_h)

    # Only pad/copy X when the shape actually needs it.
    x2 = x.reshape(rows, dim)
    needs_pad = (rows_p != rows) or (dim_p != dim)
    if needs_pad:
        x2 = jnp.zeros((rows_p, dim_p), x.dtype).at[:rows, :dim].set(x2)

    est = weight_bytes + bias_bytes + _tile_bytes(tile_m)
    vmem_limit = int(min(cap - (2 << 20), max(32 << 20, int(est * 1.4) + (2 << 20))))

    if use_scratch:
        kernel = partial(_ffn_kernel_acc, exact_gelu=exact_gelu)
        scratch = [pltpu.VMEM((tile_m, dim_p), jnp.float32)]
    else:
        kernel = partial(_ffn_kernel_inplace, exact_gelu=exact_gelu)
        scratch = []

    out = pl.pallas_call(
        kernel,
        out_shape=jax.ShapeDtypeStruct((rows_p, dim_p), out_dtype),
        grid_spec=pltpu.PrefetchScalarGridSpec(
            num_scalar_prefetch=0,
            grid=grid,
            in_specs=[
                pl.BlockSpec((tile_m, dim_p), lambda i, k: (i, 0)),   # x row tile
                pl.BlockSpec((dim_p, tile_h), lambda i, k: (0, k)),   # W1^T chunk
                pl.BlockSpec((1, tile_h), lambda i, k: (0, k)),       # b1 chunk
                pl.BlockSpec((tile_h, dim_p), lambda i, k: (k, 0)),   # W2^T chunk
                pl.BlockSpec((1, dim_p), lambda i, k: (0, 0)),        # b2
            ],
            out_specs=pl.BlockSpec((tile_m, dim_p), lambda i, k: (i, 0)),
            scratch_shapes=scratch,
        ),
        compiler_params=pltpu.CompilerParams(
            dimension_semantics=("parallel", "arbitrary"),
            vmem_limit_bytes=vmem_limit,
        ),
    )(x2, params["w1_t"], params["b1"], params["w2_t"], params["b2"])

    if needs_pad:
        out = out[:rows, :dim]
    return out.reshape(x.shape)


def feedforward_ref(x, w1, b1, w2, b2):
    """Pure-JAX reference (eval-mode dropout, exact erf GELU)."""
    h = jnp.einsum("...d,hd->...h", x, w1) + b1
    h = 0.5 * h * (1.0 + lax.erf(h / jnp.sqrt(2.0)))
    y = jnp.einsum("...h,dh->...d", h, w2) + b2
    return y


def _make_params(key, dim, hidden):
    kw1, kb1, kw2, kb2 = jax.random.split(key, 4)
    bound1 = 1.0 / math.sqrt(dim)
    w1 = jax.random.uniform(kw1, (hidden, dim), jnp.float32, -bound1, bound1)
    b1 = jax.random.uniform(kb1, (hidden,), jnp.float32, -bound1, bound1)
    bound2 = 1.0 / math.sqrt(hidden)
    w2 = jax.random.uniform(kw2, (dim, hidden), jnp.float32, -bound2, bound2)
    b2 = jax.random.uniform(kb2, (dim,), jnp.float32, -bound2, bound2)
    return w1, b1, w2, b2


if __name__ == "__main__":
    key = jax.random.PRNGKey(0)
    k1, k2, k3, k4 = jax.random.split(key, 4)

    # --- Test 1: f32 compute path (bit-faithful vs exact-erf reference) ---------
    B, N, dim, hidden = 2, 8, 32, 64
    x = jax.random.normal(k1, (B, N, dim), dtype=jnp.float32)
    w1, b1, w2, b2 = _make_params(k2, dim, hidden)
    params_f32 = prepare_ffn_params(w1, b1, w2, b2, compute_dtype=jnp.float32)
    y = jax.block_until_ready(feedforward_pallas(x, params_f32))
    y_ref = feedforward_ref(x, w1, b1, w2, b2)
    assert y.shape == (B, N, dim)
    assert jnp.allclose(y, y_ref, atol=1e-5, rtol=1e-5), "mismatch vs reference (test 1)"

    # --- Test 2: default bf16 MXU path; exercise row tiling + hidden chunking ---
    B2, N2, dim2, hidden2 = 2, 24, 64, 256
    x2 = jax.random.normal(k3, (B2, N2, dim2), dtype=jnp.float32)
    w1b, b1b, w2b, b2b = _make_params(k4, dim2, hidden2)
    params_bf16 = prepare_ffn_params(w1b, b1b, w2b, b2b, tile_h=128)   # 2 hidden chunks
    y2 = jax.block_until_ready(feedforward_pallas(x2, params_bf16, tile_m=16))  # 3 row tiles
    y2_ref = feedforward_ref(x2, w1b, b1b, w2b, b2b)
    assert y2.shape == (B2, N2, dim2)
    assert jnp.allclose(y2, y2_ref, atol=3e-2, rtol=3e-2), "mismatch vs reference (test 2)"

    # --- Test 3: bf16 activations -> f32 scratch-accumulator path ----------------
    x3 = x.astype(jnp.bfloat16)
    params_def = prepare_ffn_params(w1, b1, w2, b2)   # default bf16 weights, auto tile_h
    y3 = jax.block_until_ready(feedforward_pallas(x3, params_def))
    y3_ref = feedforward_ref(x3, w1, b1, w2, b2)
    assert y3.shape == (B, N, dim) and y3.dtype == jnp.bfloat16
    assert jnp.allclose(y3.astype(jnp.float32), y3_ref.astype(jnp.float32),
                        atol=5e-2, rtol=5e-2), "mismatch vs reference (test 3)"

    print("KERNEL_OK")
</pallas_src>

<mosaic_0001>
module attributes {stable_mosaic.version = 11 : i64} {
  func.func @_ffn_kernel_inplace(%arg0: i32, %arg1: i32, %arg2: memref<16x128xf32, #tpu.memory_space<vmem>>, %arg3: memref<128x128xf32, #tpu.memory_space<vmem>>, %arg4: memref<1x128xf32, #tpu.memory_space<vmem>>, %arg5: memref<128x128xf32, #tpu.memory_space<vmem>>, %arg6: memref<1x128xf32, #tpu.memory_space<vmem>>, %arg7: memref<16x128xf32, #tpu.memory_space<vmem>>) attributes {dimension_semantics = [#tpu.dimension_semantics<parallel>, #tpu.dimension_semantics<arbitrary>], iteration_bounds = array<i64: 1, 1>, scalar_prefetch = 0 : i64, scratch_operands = 0 : i64, tpu.core_type = #tpu.core_type<tc>, window_params = [{transform_indices = @transform_0, window_bounds = array<i64: 16, 128>}, {transform_indices = @transform_1, window_bounds = array<i64: 128, 128>}, {transform_indices = @transform_2, window_bounds = array<i64: 1, 128>}, {transform_indices = @transform_3, window_bounds = array<i64: 128, 128>}, {pipeline_mode = #tpu.pipeline_mode<synchronous>, transform_indices = @transform_4, window_bounds = array<i64: 1, 128>}, {transform_indices = @transform_5, window_bounds = array<i64: 16, 128>}]} {
    %c0 = arith.constant 0 : index
    %c0_0 = arith.constant 0 : index
    %0 = vector.load %arg2[%c0, %c0_0] : memref<16x128xf32, #tpu.memory_space<vmem>>, vector<16x128xf32>
    %c0_1 = arith.constant 0 : index
    %c0_2 = arith.constant 0 : index
    %1 = vector.load %arg3[%c0_1, %c0_2] : memref<128x128xf32, #tpu.memory_space<vmem>>, vector<128x128xf32>
    %cst = arith.constant dense<0.000000e+00> : vector<16x128xf32>
    %2 = tpu.matmul %0, %1, %cst {dimension_numbers = #tpu.dot_dimension_numbers<[1], [0], [0], [1], [0, 0, 1, 1], [], []>} : vector<16x128xf32>, vector<128x128xf32>, vector<16x128xf32> -> vector<16x128xf32>
    %c0_3 = arith.constant 0 : index
    %c0_4 = arith.constant 0 : index
    %3 = vector.load %arg4[%c0_3, %c0_4] : memref<1x128xf32, #tpu.memory_space<vmem>>, vector<1x128xf32>
    %4 = vector.broadcast %3 : vector<1x128xf32> to vector<16x128xf32>
    %5 = arith.addf %2, %4 : vector<16x128xf32>
    %cst_5 = arith.constant 5.000000e-01 : f32
    %6 = vector.broadcast %cst_5 : f32 to vector<16x128xf32>
    %7 = arith.mulf %6, %5 : vector<16x128xf32>
    %cst_6 = arith.constant 0.707106769 : f32
    %8 = vector.broadcast %cst_6 : f32 to vector<16x128xf32>
    %9 = arith.mulf %5, %8 : vector<16x128xf32>
    %10 = math.erf %9 : vector<16x128xf32>
    %cst_7 = arith.constant 1.000000e+00 : f32
    %11 = vector.broadcast %cst_7 : f32 to vector<16x128xf32>
    %12 = arith.addf %11, %10 : vector<16x128xf32>
    %13 = arith.mulf %7, %12 : vector<16x128xf32>
    %c0_8 = arith.constant 0 : index
    %c0_9 = arith.constant 0 : index
    %14 = vector.load %arg5[%c0_8, %c0_9] : memref<128x128xf32, #tpu.memory_space<vmem>>, vector<128x128xf32>
    %cst_10 = arith.constant dense<0.000000e+00> : vector<16x128xf32>
    %15 = tpu.matmul %13, %14, %cst_10 {dimension_numbers = #tpu.dot_dimension_numbers<[1], [0], [0], [1], [0, 0, 1, 1], [], []>} : vector<16x128xf32>, vector<128x128xf32>, vector<16x128xf32> -> vector<16x128xf32>
    %c0_i32 = arith.constant 0 : i32
    %16 = arith.cmpi eq, %arg1, %c0_i32 : i32
    %17 = arith.extui %16 : i1 to i32
    %c0_i32_11 = arith.constant 0 : i32
    %18 = arith.cmpi ne, %17, %c0_i32_11 : i32
    scf.if %18 {
      %c0_16 = arith.constant 0 : index
      %c0_17 = arith.constant 0 : index
      %25 = vector.load %arg7[%c0_16, %c0_17] : memref<16x128xf32, #tpu.memory_space<vmem>>, vector<16x128xf32>
      tpu.vector_store %arg7[%c0_16, %c0_17], %15 {strides = array<i32>} : memref<16x128xf32, #tpu.memory_space<vmem>>, vector<16x128xf32>,
    } else {
    }
    %c0_i32_12 = arith.constant 0 : i32
    %19 = arith.cmpi sgt, %arg1, %c0_i32_12 : i32
    %20 = arith.extui %19 : i1 to i32
    %c0_i32_13 = arith.constant 0 : i32
    %21 = arith.cmpi ne, %20, %c0_i32_13 : i32
    scf.if %21 {
      %c0_16 = arith.constant 0 : index
      %c0_17 = arith.constant 0 : index
      %25 = vector.load %arg7[%c0_16, %c0_17] : memref<16x128xf32, #tpu.memory_space<vmem>>, vector<16x128xf32>
      %26 = arith.addf %25, %15 : vector<16x128xf32>
      %c0_18 = arith.constant 0 : index
      %c0_19 = arith.constant 0 : index
      %27 = vector.load %arg7[%c0_18, %c0_19] : memref<16x128xf32, #tpu.memory_space<vmem>>, vector<16x128xf32>
      tpu.vector_store %arg7[%c0_18, %c0_19], %26 {strides = array<i32>} : memref<16x128xf32, #tpu.memory_space<vmem>>, vector<16x128xf32>,
    } else {
    }
    %c0_i32_14 = arith.constant 0 : i32
    %22 = arith.cmpi eq, %arg1, %c0_i32_14 : i32
    %23 = arith.extui %22 : i1 to i32
    %c0_i32_15 = arith.constant 0 : i32
    %24 = arith.cmpi ne, %23, %c0_i32_15 : i32
    scf.if %24 {
      %c0_16 = arith.constant 0 : index
      %c0_17 = arith.constant 0 : index
      %25 = vector.load %arg7[%c0_16, %c0_17] : memref<16x128xf32, #tpu.memory_space<vmem>>, vector<16x128xf32>
      %c0_18 = arith.constant 0 : index
      %c0_19 = arith.constant 0 : index
      %26 = vector.load %arg6[%c0_18, %c0_19] : memref<1x128xf32, #tpu.memory_space<vmem>>, vector<1x128xf32>
      %27 = vector.broadcast %26 : vector<1x128xf32> to vector<16x128xf32>
      %28 = arith.addf %25, %27 : vector<16x128xf32>
      %c0_20 = arith.constant 0 : index
      %c0_21 = arith.constant 0 : index
      %29 = vector.load %arg7[%c0_20, %c0_21] : memref<16x128xf32, #tpu.memory_space<vmem>>, vector<16x128xf32>
      tpu.vector_store %arg7[%c0_20, %c0_21], %28 {strides = array<i32>} : memref<16x128xf32, #tpu.memory_space<vmem>>, vector<16x128xf32>,
    } else {
    }
    return
  }
  func.func @transform_0(%arg0: i32, %arg1: i32) -> (i32, i32) {
    %c0_i32 = arith.constant 0 : i32
    %c0_i32_0 = arith.constant 0 : i32
    return %arg0, %c0_i32 : i32, i32
  }
  func.func @transform_1(%arg0: i32, %arg1: i32) -> (i32, i32) {
    %c0_i32 = arith.constant 0 : i32
    %c0_i32_0 = arith.constant 0 : i32
    return %c0_i32, %arg1 : i32, i32
  }
  func.func @transform_2(%arg0: i32, %arg1: i32) -> (i32, i32) {
    %c0_i32 = arith.constant 0 : i32
    %c0_i32_0 = arith.constant 0 : i32
    return %c0_i32, %arg1 : i32, i32
  }
  func.func @transform_3(%arg0: i32, %arg1: i32) -> (i32, i32) {
    %c0_i32 = arith.constant 0 : i32
    %c0_i32_0 = arith.constant 0 : i32
    return %arg1, %c0_i32 : i32, i32
  }
  func.func @transform_4(%arg0: i32, %arg1: i32) -> (i32, i32) {
    %c0_i32 = arith.constant 0 : i32
    %c0_i32_0 = arith.constant 0 : i32
    %c0_i32_1 = arith.constant 0 : i32
    return %c0_i32, %c0_i32_0 : i32, i32
  }
  func.func @transform_5(%arg0: i32, %arg1: i32) -> (i32, i32) {
    %c0_i32 = arith.constant 0 : i32
    %c0_i32_0 = arith.constant 0 : i32
    return %arg0, %c0_i32 : i32, i32
  }
}

</mosaic_0001>

<llo_original>
// kernel: tpu_custom_call.1
$region0: #{tpu_custom_call.1}
  #allocation0 [shape = 'u32[]', space=smem, size = 0x4, offset = 0x4, fixed_abs, tag = 'smem constant byte address 0x4 - core index']
  #allocation1 [shape = 'u32[144,128]{1,0:T(1,128)}', space=vmem, size = 0x12000, scoped, tag = 'internal scratch']
  %s0 = inlined_call_operand.hbm [shape: f32[16,128], index: 0, kind: input, shape index: {}]
  %s1 = inlined_call_operand.hbm [shape: f32[128,128], index: 1, kind: input, shape index: {}]
  %s2 = inlined_call_operand.vmem [shape: f32[1,128], index: 2, kind: input, shape index: {}]
  %s3 = inlined_call_operand.hbm [shape: f32[128,128], index: 3, kind: input, shape index: {}]
  %s4 = inlined_call_operand.vmem [shape: f32[1,128], index: 4, kind: input, shape index: {}]
  %s5 = inlined_call_operand.hbm [shape: f32[16,128], index: 5, kind: output, shape index: {}]
  %s6 = sld [smem:[#allocation0]]
  $region54: #{tpu_custom_call.1} parent=0
    _
  %s8 = ssub.s32 1, %s6
  %s9 = scalar_select 0, %s8, %s6
  $region1: #{tpu_custom_call.1} parent=0
    #allocation2 [shape = 'u8[8192]{0}', space=vmem, size = 0x2000, scoped, tag = 'input window, operand 0, single buffered']
    #allocation3 [shape = 's32[1]{0}', space=sflag, size = 0x4, scoped, tag = 'scoped memory for tpu_custom_call.1']
    #allocation4 [shape = 's32[1]{0}', space=sflag, size = 0x4, scoped, tag = 'scoped memory for tpu_custom_call.1']
    #allocation5 [shape = 'u8[65536]{0}', space=vmem, size = 0x10000, scoped, tag = 'input window, operand 1, single buffered']
    #allocation6 [shape = 's32[1]{0}', space=sflag, size = 0x4, scoped, tag = 'scoped memory for tpu_custom_call.1']
    #allocation7 [shape = 'u8[65536]{0}', space=vmem, size = 0x10000, scoped, tag = 'input window, operand 3, single buffered']
    #allocation8 [shape = 'u8[8192]{0}', space=vmem, size = 0x2000, scoped, tag = 'output window, operand 0, single buffered']
    %10 = vsyncpa [#allocation3], 0
    %11 = vsyncpa [#allocation6], 0
    %12 = vsyncpa [#allocation4], 0
    // Predicated region
    $region2: #{tpu_custom_call.1} parent=1 // pred_check
      _
    $region3: #{tpu_custom_call.1} parent=1 // pred_check_branch
      %14 = sbr.rel (0) target = $region5
    $region4: #{tpu_custom_call.1} parent=1 // pred_region
      %s16 = ssub.s32 256, 256
      %17 = vsyncadd [#allocation3], %s16
      %s18 = sshll.u32 [#allocation2], 4
      %s19 = int_to_ptr.vmem [resolvable:$true] %s18
      %24 = dma.hbm_to_vmem [thread:$0]  %s0, 256, %s19, [#allocation3], 128, 128, 8
    $region5: #{tpu_custom_call.1} parent=1 // pred_fallthru
      _
    // Predicated region
    $region6: #{tpu_custom_call.1} parent=1 // pred_check
      _
    $region7: #{tpu_custom_call.1} parent=1 // pred_check_branch
      %26 = sbr.rel (0) target = $region9
    $region8: #{tpu_custom_call.1} parent=1 // pred_region
      %s28 = ssub.s32 2048, 2048
      %29 = vsyncadd [#allocation6], %s28
      %s30 = sshll.u32 [#allocation5], 4
      %s31 = int_to_ptr.vmem [resolvable:$true] %s30
      %36 = dma.hbm_to_vmem [thread:$0]  %s1, 2048, %s31, [#allocation6], 128, 128, 8
    $region9: #{tpu_custom_call.1} parent=1 // pred_fallthru
      _
    // Predicated region
    $region10: #{tpu_custom_call.1} parent=1 // pred_check
      _
    $region11: #{tpu_custom_call.1} parent=1 // pred_check_branch
      %38 = sbr.rel (0) target = $region13
    $region12: #{tpu_custom_call.1} parent=1 // pred_region
      _
    $region13: #{tpu_custom_call.1} parent=1 // pred_fallthru
      _
    // Predicated region
    $region14: #{tpu_custom_call.1} parent=1 // pred_check
      _
    $region15: #{tpu_custom_call.1} parent=1 // pred_check_branch
      %40 = sbr.rel (0) target = $region17
    $region16: #{tpu_custom_call.1} parent=1 // pred_region
      %s42 = ssub.s32 2048, 2048
      %43 = vsyncadd [#allocation6], %s42
      %s44 = sshll.u32 [#allocation7], 4
      %s45 = int_to_ptr.vmem [resolvable:$true] %s44
      %50 = dma.hbm_to_vmem [thread:$0]  %s3, 2048, %s45, [#allocation6], 128, 128, 8
    $region17: #{tpu_custom_call.1} parent=1 // pred_fallthru
      _
    // Predicated region
    $region18: #{tpu_custom_call.1} parent=1 // pred_check
      _
    $region19: #{tpu_custom_call.1} parent=1 // pred_check_branch
      %52 = sbr.rel (0) target = $region21
    $region20: #{tpu_custom_call.1} parent=1 // pred_region
      _
    $region21: #{tpu_custom_call.1} parent=1 // pred_fallthru
      _
    // Predicated region
    $region22: #{tpu_custom_call.1} parent=1 // pred_check
      _
    $region23: #{tpu_custom_call.1} parent=1 // pred_check_branch
      %54 = sbr.rel (0) target = $region25
    $region24: #{tpu_custom_call.1} parent=1 // pred_region
      %55 = dma.done [#allocation3], 256
    $region25: #{tpu_custom_call.1} parent=1 // pred_fallthru
      _
    // Predicated region
    $region26: #{tpu_custom_call.1} parent=1 // pred_check
      _
    $region27: #{tpu_custom_call.1} parent=1 // pred_check_branch
      %57 = sbr.rel (0) target = $region29
    $region28: #{tpu_custom_call.1} parent=1 // pred_region
      %58 = dma.done [#allocation6], 2048
    $region29: #{tpu_custom_call.1} parent=1 // pred_fallthru
      _
    // Predicated region
    $region30: #{tpu_custom_call.1} parent=1 // pred_check
      _
    $region31: #{tpu_custom_call.1} parent=1 // pred_check_branch
      %60 = sbr.rel (0) target = $region33
    $region32: #{tpu_custom_call.1} parent=1 // pred_region
      %61 = dma.done [#allocation6], 2048
    $region33: #{tpu_custom_call.1} parent=1 // pred_fallthru
      _
    %v62 = vld [vmem:[#allocation2] sm:$0xff]
    %v63 = vld [vmem:[#allocation2 + $0x8] sm:$0xff]
    %v64 = vld [vmem:[#allocation5] sm:$0xff]
    %v65 = vld [vmem:[#allocation5 + $0x8] sm:$0xff]
    %v66 = vld [vmem:[#allocation5 + $0x10] sm:$0xff]
    %v67 = vld [vmem:[#allocation5 + $0x18] sm:$0xff]
    %v68 = vld [vmem:[#allocation5 + $0x20] sm:$0xff]
    %v69 = vld [vmem:[#allocation5 + $0x28] sm:$0xff]
    %v70 = vld [vmem:[#allocation5 + $0x30] sm:$0xff]
    %v71 = vld [vmem:[#allocation5 + $0x38] sm:$0xff]
    %v72 = vld [vmem:[#allocation5 + $0x40] sm:$0xff]
    %v73 = vld [vmem:[#allocation5 + $0x48] sm:$0xff]
    %v74 = vld [vmem:[#allocation5 + $0x50] sm:$0xff]
    %v75 = vld [vmem:[#allocation5 + $0x58] sm:$0xff]
    %v76 = vld [vmem:[#allocation5 + $0x60] sm:$0xff]
    %v77 = vld [vmem:[#allocation5 + $0x68] sm:$0xff]
    %v78 = vld [vmem:[#allocation5 + $0x70] sm:$0xff]
    %v79 = vld [vmem:[#allocation5 + $0x78] sm:$0xff]
    %v80 = vld [vmem:[%s2] sm:$0x1]
    %v82 = vlaneseq
    %v83 = vshrl.u32 %v82, 7
    %v84 = vsub.s32 0, %v83
    %v85 = vrot.slane %v80, %v84
    %87 = vmatprep.subr.mxu0 0.0
    %88 = vmatpush1.msra.mxu0 %v64
    %89 = vmatprep.subr.mxu0 0.0
    %90 = vmatpush1.msra.mxu0 %v65
    %91 = vmatprep.subr.mxu0 0.0
    %92 = vmatpush1.msra.mxu0 %v66
    %93 = vmatprep.subr.mxu0 0.0
    %94 = vmatpush1.msra.mxu0 %v67
    %95 = vmatprep.subr.mxu0 0.0
    %96 = vmatpush1.msra.mxu0 %v68
    %97 = vmatprep.subr.mxu0 0.0
    %98 = vmatpush1.msra.mxu0 %v69
    %99 = vmatprep.subr.mxu0 0.0
    %100 = vmatpush1.msra.mxu0 %v70
    %101 = vmatprep.subr.mxu0 0.0
    %102 = vmatpush1.msra.mxu0 %v71
    %103 = vmatprep.subr.mxu0 0.0
    %104 = vmatpush1.msra.mxu0 %v72
    %105 = vmatprep.subr.mxu0 0.0
    %106 = vmatpush1.msra.mxu0 %v73
    %107 = vmatprep.subr.mxu0 0.0
    %108 = vmatpush1.msra.mxu0 %v74
    %109 = vmatprep.subr.mxu0 0.0
    %110 = vmatpush1.msra.mxu0 %v75
    %111 = vmatprep.subr.mxu0 0.0
    %112 = vmatpush1.msra.mxu0 %v76
    %113 = vmatprep.subr.mxu0 0.0
    %114 = vmatpush1.msra.mxu0 %v77
    %115 = vmatprep.subr.mxu0 0.0
    %116 = vmatpush1.msra.mxu0 %v78
    %117 = vmatprep.subr.mxu0 0.0
    %118 = vmatpush1.msra.mxu0 %v79
    %119 = vmatprep.subr.mxu0 0.0
    %120 = vmatpush1.msra.mxu0 0.0
    %121 = vmatprep.subr.mxu0 0.0
    %122 = vmatpush1.msra.mxu0 0.0
    %123 = vmatprep.subr.mxu0 0.0
    %124 = vmatpush1.msra.mxu0 0.0
    %125 = vmatprep.subr.mxu0 0.0
    %126 = vmatpush1.msra.mxu0 0.0
    %127 = vmatprep.subr.mxu0 0.0
    %128 = vmatpush1.msra.mxu0 0.0
    %129 = vmatprep.subr.mxu0 0.0
    %130 = vmatpush1.msra.mxu0 0.0
    %131 = vmatprep.subr.mxu0 0.0
    %132 = vmatpush1.msra.mxu0 0.0
    %133 = vmatprep.subr.mxu0 0.0
    %134 = vmatpush1.msra.mxu0 0.0
    %135 = vmatprep.subr.mxu0 0.0
    %136 = vmatpush1.msra.mxu0 0.0
    %137 = vmatprep.subr.mxu0 0.0
    %138 = vmatpush1.msra.mxu0 0.0
    %139 = vmatprep.subr.mxu0 0.0
    %140 = vmatpush1.msra.mxu0 0.0
    %141 = vmatprep.subr.mxu0 0.0
    %142 = vmatpush1.msra.mxu0 0.0
    %143 = vmatprep.subr.mxu0 0.0
    %144 = vmatpush1.msra.mxu0 0.0
    %145 = vmatprep.subr.mxu0 0.0
    %146 = vmatpush1.msra.mxu0 0.0
    %147 = vmatprep.subr.mxu0 0.0
    %148 = vmatpush1.msra.mxu0 0.0
    %149 = vmatprep.subr.mxu0 0.0
    %150 = vmatpush1.msra.mxu0 0.0
    %151 = vmatprep.mubr.f32.mxu0 0.0
    %152 = vmatmul.mubr.f32.gmra.mrb[0].mxu0 %v62
    %v153 = vpop.f32.mrb[0].mxu0
    %v154 = vadd.f32 %v85, %v153
    %v155 = vpop.f32.mrb[0].mxu0
    %156 = vmatprep.mubr.f32.mxu0 0.0
    %157 = vmatmul.mubr.f32.gmra.mrb[0].mxu0 %v63
    %v158 = vpop.f32.mrb[0].mxu0
    %v159 = vadd.f32 %v85, %v158
    %v160 = vpop.f32.mrb[0].mxu0
    %161 = vdwg.mxu0
    %v162 = vmul.f32 %v154, 0.5
    %v163 = vmul.f32 %v159, 0.5
    %v164 = vmul.f32 %v154, 0.70710677
    %v165 = vmul.f32 %v159, 0.70710677
    %v166 = verf.f32.pop %v164
    %v167 = verf.f32.pop %v165
    %v168 = vadd.f32 %v166, 1.0
    %v169 = vadd.f32 %v167, 1.0
    %v170 = vmul.f32 %v162, %v168
    %v171 = vmul.f32 %v163, %v169
    %v172 = vld [vmem:[#allocation7] sm:$0xff]
    %v173 = vld [vmem:[#allocation7 + $0x8] sm:$0xff]
    %v174 = vld [vmem:[#allocation7 + $0x10] sm:$0xff]
    %v175 = vld [vmem:[#allocation7 + $0x18] sm:$0xff]
    %v176 = vld [vmem:[#allocation7 + $0x20] sm:$0xff]
    %v177 = vld [vmem:[#allocation7 + $0x28] sm:$0xff]
    %v178 = vld [vmem:[#allocation7 + $0x30] sm:$0xff]
    %v179 = vld [vmem:[#allocation7 + $0x38] sm:$0xff]
    %v180 = vld [vmem:[#allocation7 + $0x40] sm:$0xff]
    %v181 = vld [vmem:[#allocation7 + $0x48] sm:$0xff]
    %v182 = vld [vmem:[#allocation7 + $0x50] sm:$0xff]
    %v183 = vld [vmem:[#allocation7 + $0x58] sm:$0xff]
    %v184 = vld [vmem:[#allocation7 + $0x60] sm:$0xff]
    %v185 = vld [vmem:[#allocation7 + $0x68] sm:$0xff]
    %v186 = vld [vmem:[#allocation7 + $0x70] sm:$0xff]
    %v187 = vld [vmem:[#allocation7 + $0x78] sm:$0xff]
    %188 = vmatprep.subr.mxu0 0.0
    %189 = vmatpush1.msra.mxu0 %v172
    %190 = vmatprep.subr.mxu0 0.0
    %191 = vmatpush1.msra.mxu0 %v173
    %192 = vmatprep.subr.mxu0 0.0
    %193 = vmatpush1.msra.mxu0 %v174
    %194 = vmatprep.subr.mxu0 0.0
    %195 = vmatpush1.msra.mxu0 %v175
    %196 = vmatprep.subr.mxu0 0.0
    %197 = vmatpush1.msra.mxu0 %v176
    %198 = vmatprep.subr.mxu0 0.0
    %199 = vmatpush1.msra.mxu0 %v177
    %200 = vmatprep.subr.mxu0 0.0
    %201 = vmatpush1.msra.mxu0 %v178
    %202 = vmatprep.subr.mxu0 0.0
    %203 = vmatpush1.msra.mxu0 %v179
    %204 = vmatprep.subr.mxu0 0.0
    %205 = vmatpush1.msra.mxu0 %v180
    %206 = vmatprep.subr.mxu0 0.0
    %207 = vmatpush1.msra.mxu0 %v181
    %208 = vmatprep.subr.mxu0 0.0
    %209 = vmatpush1.msra.mxu0 %v182
    %210 = vmatprep.subr.mxu0 0.0
    %211 = vmatpush1.msra.mxu0 %v183
    %212 = vmatprep.subr.mxu0 0.0
    %213 = vmatpush1.msra.mxu0 %v184
    %214 = vmatprep.subr.mxu0 0.0
    %215 = vmatpush1.msra.mxu0 %v185
    %216 = vmatprep.subr.mxu0 0.0
    %217 = vmatpush1.msra.mxu0 %v186
    %218 = vmatprep.subr.mxu0 0.0
    %219 = vmatpush1.msra.mxu0 %v187
    %220 = vmatprep.subr.mxu0 0.0
    %221 = vmatpush1.msra.mxu0 0.0
    %222 = vmatprep.subr.mxu0 0.0
    %223 = vmatpush1.msra.mxu0 0.0
    %224 = vmatprep.subr.mxu0 0.0
    %225 = vmatpush1.msra.mxu0 0.0
    %226 = vmatprep.subr.mxu0 0.0
    %227 = vmatpush1.msra.mxu0 0.0
    %228 = vmatprep.subr.mxu0 0.0
    %229 = vmatpush1.msra.mxu0 0.0
    %230 = vmatprep.subr.mxu0 0.0
    %231 = vmatpush1.msra.mxu0 0.0
    %232 = vmatprep.subr.mxu0 0.0
    %233 = vmatpush1.msra.mxu0 0.0
    %234 = vmatprep.subr.mxu0 0.0
    %235 = vmatpush1.msra.mxu0 0.0
    %236 = vmatprep.subr.mxu0 0.0
    %237 = vmatpush1.msra.mxu0 0.0
    %238 = vmatprep.subr.mxu0 0.0
    %239 = vmatpush1.msra.mxu0 0.0
    %240 = vmatprep.subr.mxu0 0.0
    %241 = vmatpush1.msra.mxu0 0.0
    %242 = vmatprep.subr.mxu0 0.0
    %243 = vmatpush1.msra.mxu0 0.0
    %244 = vmatprep.subr.mxu0 0.0
    %245 = vmatpush1.msra.mxu0 0.0
    %246 = vmatprep.subr.mxu0 0.0
    %247 = vmatpush1.msra.mxu0 0.0
    %248 = vmatprep.subr.mxu0 0.0
    %249 = vmatpush1.msra.mxu0 0.0
    %250 = vmatprep.subr.mxu0 0.0
    %251 = vmatpush1.msra.mxu0 0.0
    %252 = vmatprep.mubr.f32.mxu0 0.0
    %253 = vmatmul.mubr.f32.gmra.mrb[0].mxu0 %v170
    %v254 = vpop.f32.mrb[0].mxu0
    %v255 = vadd.f32 0.0, %v254
    %v256 = vpop.f32.mrb[0].mxu0
    %257 = vmatprep.mubr.f32.mxu0 0.0
    %258 = vmatmul.mubr.f32.gmra.mrb[0].mxu0 %v171
    %v259 = vpop.f32.mrb[0].mxu0
    %v260 = vadd.f32 0.0, %v259
    %v261 = vpop.f32.mrb[0].mxu0
    %262 = vdwg.mxu0
    %p263 = scmp.eq.s32.totalorder 0, 0
    // Predicated region
    $region34: #{tpu_custom_call.1} parent=1 // pred_check
      %p264 = pneg %p263
    $region35: #{tpu_custom_call.1} parent=1 // pred_check_branch
      %266 = sbr.rel (%p264) target = $region37
    $region36: #{tpu_custom_call.1} parent=1 // pred_region
      %267 = vst [vmem:[#allocation8] sm:$0xff] %v255
      %268 = vst [vmem:[#allocation8 + $0x8] sm:$0xff] %v260
    $region37: #{tpu_custom_call.1} parent=1 // pred_fallthru
      _
    %p269 = scmp.gt.s32.totalorder 0, 0
    // Predicated region
    $region38: #{tpu_custom_call.1} parent=1 // pred_check
      %p270 = pneg %p269
    $region39: #{tpu_custom_call.1} parent=1 // pred_check_branch
      %272 = sbr.rel (%p270) target = $region41
    $region40: #{tpu_custom_call.1} parent=1 // pred_region
      %v273 = vld [vmem:[#allocation8] sm:$0xff]
      %v274 = vld [vmem:[#allocation8 + $0x8] sm:$0xff]
      %v275 = vadd.f32 %v273, %v255
      %v276 = vadd.f32 %v274, %v260
      %277 = vst [vmem:[#allocation8] sm:$0xff] %v275
      %278 = vst [vmem:[#allocation8 + $0x8] sm:$0xff] %v276
    $region41: #{tpu_custom_call.1} parent=1 // pred_fallthru
      _
    // Predicated region
    $region42: #{tpu_custom_call.1} parent=1 // pred_check
      %p279 = pneg %p263
    $region43: #{tpu_custom_call.1} parent=1 // pred_check_branch
      %281 = sbr.rel (%p279) target = $region45
    $region44: #{tpu_custom_call.1} parent=1 // pred_region
      %v282 = vld [vmem:[#allocation8] sm:$0xff]
      %v283 = vld [vmem:[#allocation8 + $0x8] sm:$0xff]
      %v284 = vld [vmem:[%s4] sm:$0x1]
      %v286 = vlaneseq
      %v287 = vshrl.u32 %v286, 7
      %v288 = vsub.s32 0, %v287
      %v289 = vrot.slane %v284, %v288
      %v291 = vadd.f32 %v282, %v289
      %v292 = vadd.f32 %v283, %v289
      %293 = vst [vmem:[#allocation8] sm:$0xff] %v291
      %294 = vst [vmem:[#allocation8 + $0x8] sm:$0xff] %v292
    $region45: #{tpu_custom_call.1} parent=1 // pred_fallthru
      _
    // Predicated region
    $region46: #{tpu_custom_call.1} parent=1 // pred_check
      _
    $region47: #{tpu_custom_call.1} parent=1 // pred_check_branch
      %296 = sbr.rel (0) target = $region49
    $region48: #{tpu_custom_call.1} parent=1 // pred_region
      %s298 = ssub.s32 256, 256
      %299 = vsyncadd [#allocation4], %s298
      %s300 = sshll.u32 [#allocation8], 4
      %s301 = int_to_ptr.vmem [resolvable:$true] %s300
      %306 = dma.vmem_to_hbm [thread:$0]  %s301, 256, %s5, [#allocation4], 128, 128, 8
    $region49: #{tpu_custom_call.1} parent=1 // pred_fallthru
      _
    // Predicated region
    $region50: #{tpu_custom_call.1} parent=1 // pred_check
      _
    $region51: #{tpu_custom_call.1} parent=1 // pred_check_branch
      %308 = sbr.rel (0) target = $region53
    $region52: #{tpu_custom_call.1} parent=1 // pred_region
      %309 = dma.done [#allocation4], 256
    $region53: #{tpu_custom_call.1} parent=1 // pred_fallthru
      _
    %310 = vsyncpa [#allocation3], 1
    %311 = vsyncpa [#allocation6], 1
    %312 = vsyncpa [#allocation4], 1

</llo_original>
